<compile_context>
chip_gen: v5e
topology: v5e:2x2
jax: 0.10.0
libtpu: 0.0.40
codegen_flags: <defaults>
</compile_context>

<pallas_src>
import jax
import jax.numpy as jnp
from jax.experimental import pallas as pl
from jax.experimental.pallas import tpu as pltpu


# ---------------------------------------------------------------------------
# __init__: build the encoding table (reproduces the PyTorch module exactly,
# including the quirky div_term = two_i / 10000**(two_i/d_model)).
# ---------------------------------------------------------------------------
def build_encodings(d_model: int, max_len: int = 5000,
                    dtype=jnp.float32) -> jnp.ndarray:
    position = jnp.arange(0, max_len, dtype=jnp.float32)[:, None]   # (max_len, 1)
    two_i = jnp.arange(0, d_model, 2, dtype=jnp.float32)            # (ceil(d/2),)
    div_term = two_i / jnp.power(10000.0, two_i / d_model)
    angles = position * div_term                                    # (max_len, ceil(d/2))
    enc = jnp.zeros((max_len, d_model), dtype=jnp.float32)
    enc = enc.at[:, 0::2].set(jnp.sin(angles))
    n_odd = d_model // 2                                            # PyTorch odd-column count
    enc = enc.at[:, 1::2].set(jnp.cos(angles[:, :n_odd]))
    return enc.astype(dtype)   # cast hoisted to init (out of the hot path)


# ---------------------------------------------------------------------------
# Kernel
# ---------------------------------------------------------------------------
def _add_pe_kernel(x_ref, pe_ref, o_ref):
    # x_ref / o_ref: (1, tr, lane) block of one batch element.
    # pe_ref:        (tr, lane) matching PE block (may be f32 while x is bf16:
    # the add promotes on the VPU, cast happens only at the store).
    o_ref[0] = (x_ref[0] + pe_ref[...]).astype(o_ref.dtype)


# ---------------------------------------------------------------------------
# Tiling helpers
# ---------------------------------------------------------------------------
def _vmem_live_budget_bytes() -> int:
    """Budget for the live (double-buffered) pipelined blocks."""
    kind = ""
    try:
        kind = jax.devices()[0].device_kind.lower()
    except Exception:
        pass
    if "v5" in kind:          # v5e: stay under the 16 MiB scoped-VMEM default
        return 12 << 20
    return 24 << 20           # v6e / v7x: under the 32 MiB scoped default


def _pick_row_tile(rows: int, bytes_per_row: int, align: int,
                   budget: int, bcz: int) -> int:
    # budget covers double-buffered x-in, out and pe blocks: 2 * tr * bytes_per_row.
    target = max(align, budget // (2 * bytes_per_row))
    target = (target // align) * align

    if rows <= target:
        tr = rows                      # full-extent block (legal even if % 8 != 0)
    else:
        # Prefer the largest multiple of `align` that exactly divides `rows`
        # (no masked vst on a remainder tile); give up if it would shrink the
        # block by more than 2x and take a plain target-sized tile instead.
        tr = None
        if rows % align == 0:
            cand = target
            floor = max(align, target // 2)
            while cand >= floor:
                if rows % cand == 0:
                    tr = cand
                    break
                cand -= align
        if tr is None:
            tr = target

    # v7x has 2 TensorCores: make sure a tiny grid still has >= 2 steps of work.
    if bcz * ((rows + tr - 1) // tr) < 2 and tr >= 2 * align:
        tr = ((tr // 2) // align) * align
    return max(tr, 1)


# ---------------------------------------------------------------------------
# forward
# ---------------------------------------------------------------------------
def positional_encoding_forward(x: jnp.ndarray,
                                encodings: jnp.ndarray) -> jnp.ndarray:
    bcz, seq_len, d_model = x.shape
    max_len, d_enc = encodings.shape
    assert d_enc == d_model and seq_len <= max_len

    x_itemsize = jnp.dtype(x.dtype).itemsize
    pe_itemsize = jnp.dtype(encodings.dtype).itemsize
    n = seq_len * d_model
    n_full = max_len * d_model

    if n % 128 == 0:
        # Lane-dense path: contiguous (free) reshape so stores are unmasked
        # full-lane vst even when d_model < 128.
        lane = next(l for l in (1024, 512, 256, 128) if n % l == 0)
        rows = n // lane
        x_view = x.reshape(bcz, rows, lane)
    else:
        # TODO(synk): lane-sparse fallback (seq*d not a multiple of 128) keeps
        # the natural layout and relies on masked stores; callers with small
        # d_model should pad d_model to a multiple of 128 for full bandwidth.
        lane = d_model
        rows = seq_len
        x_view = x

    align = max(8, 32 // x_itemsize)                  # 8 f32, 16 bf16, 32 int8/fp8
    budget = _vmem_live_budget_bytes()
    bytes_per_row = lane * (2 * x_itemsize + pe_itemsize)   # x-in + out + pe
    tr = _pick_row_tile(rows, bytes_per_row, align, budget, bcz)

    # PE operand: pass the FULL table (free reshape, no per-call slice/copy)
    # whenever the block shape stays legal for it; the index_map simply never
    # selects blocks past `rows`.  Otherwise fall back to a sliced copy.
    if n_full % lane == 0 and tr % 8 == 0:
        pe_view = encodings.reshape(n_full // lane, lane)
    else:
        pe_view = encodings[:seq_len, :].reshape(rows, lane)

    grid = (pl.cdiv(rows, tr), bcz)   # batch innermost -> PE block reused across batch

    out = pl.pallas_call(
        _add_pe_kernel,
        out_shape=jax.ShapeDtypeStruct((bcz, rows, lane), x.dtype),
        grid=grid,
        in_specs=[
            pl.BlockSpec((1, tr, lane), lambda s, b: (b, s, 0)),
            pl.BlockSpec((tr, lane), lambda s, b: (s, 0)),
        ],
        out_specs=pl.BlockSpec((1, tr, lane), lambda s, b: (b, s, 0)),
        compiler_params=pltpu.CompilerParams(
            dimension_semantics=("parallel", "parallel"),
            vmem_limit_bytes=32 << 20,
        ),
        cost_estimate=pl.CostEstimate(
            flops=bcz * n,
            transcendentals=0,
            bytes_accessed=2 * bcz * n * x_itemsize + n * pe_itemsize,
        ),
    )(x_view, pe_view)

    return out.reshape(bcz, seq_len, d_model)


# ---------------------------------------------------------------------------
# Self-test
# ---------------------------------------------------------------------------
if __name__ == "__main__":
    key = jax.random.PRNGKey(0)

    # Primary small test: (batch, seq, d_model), lane-dense path.
    batch, seq_len, d_model = 2, 8, 32
    max_len = 64
    x = jax.random.normal(key, (batch, seq_len, d_model), dtype=jnp.float32)
    encodings = build_encodings(d_model, max_len)

    out = jax.block_until_ready(positional_encoding_forward(x, encodings))
    ref = x + encodings[:seq_len, :][None, :, :]
    assert out.shape == (batch, seq_len, d_model)
    assert jnp.allclose(out, ref, atol=1e-6), "mismatch (lane-dense path)"

    # Fallback path (seq*d not a multiple of 128; full-table PE blocks).
    b2, s2, d2 = 2, 40, 24
    enc2 = build_encodings(d2, 64)
    x2 = jax.random.normal(jax.random.PRNGKey(1), (b2, s2, d2), dtype=jnp.float32)
    out2 = jax.block_until_ready(positional_encoding_forward(x2, enc2))
    ref2 = x2 + enc2[:s2, :][None, :, :]
    assert jnp.allclose(out2, ref2, atol=1e-6), "mismatch (fallback path)"

    # Mixed-dtype check: bf16 activations, f32 table (promote-add, cast at store).
    x3 = jax.random.normal(jax.random.PRNGKey(2), (2, 16, 64), dtype=jnp.bfloat16)
    enc3 = build_encodings(64, 64)
    out3 = jax.block_until_ready(positional_encoding_forward(x3, enc3))
    ref3 = (x3.astype(jnp.float32) + enc3[:16][None]).astype(jnp.bfloat16)
    assert jnp.allclose(out3.astype(jnp.float32), ref3.astype(jnp.float32),
                        atol=1e-2), "mismatch (bf16 path)"

    print("KERNEL_OK")
</pallas_src>

<mosaic_0001>
module attributes {stable_mosaic.version = 11 : i64} {
  func.func @_add_pe_kernel(%arg0: i32, %arg1: i32, %arg2: memref<1x1x256xf32, #tpu.memory_space<vmem>>, %arg3: memref<1x256xf32, #tpu.memory_space<vmem>>, %arg4: memref<1x1x256xf32, #tpu.memory_space<vmem>>) attributes {dimension_semantics = [#tpu.dimension_semantics<parallel>, #tpu.dimension_semantics<parallel>], iteration_bounds = array<i64: 1, 2>, scalar_prefetch = 0 : i64, scratch_operands = 0 : i64, tpu.core_type = #tpu.core_type<tc>, window_params = [{transform_indices = @transform_0, window_bounds = array<i64: 1, 1, 256>}, {transform_indices = @transform_1, window_bounds = array<i64: 1, 256>}, {transform_indices = @transform_2, window_bounds = array<i64: 1, 1, 256>}]} {
    %c0 = arith.constant 0 : index
    %c0_0 = arith.constant 0 : index
    %c0_1 = arith.constant 0 : index
    %0 = vector.load %arg2[%c0, %c0_0, %c0_1] : memref<1x1x256xf32, #tpu.memory_space<vmem>>, vector<1x1x256xf32>
    %1 = vector.shape_cast %0 : vector<1x1x256xf32> to vector<1x256xf32>
    %c0_2 = arith.constant 0 : index
    %c0_3 = arith.constant 0 : index
    %2 = vector.load %arg3[%c0_2, %c0_3] : memref<1x256xf32, #tpu.memory_space<vmem>>, vector<1x256xf32>
    %3 = arith.addf %1, %2 : vector<1x256xf32>
    %c0_4 = arith.constant 0 : index
    %c0_5 = arith.constant 0 : index
    %c0_6 = arith.constant 0 : index
    %4 = vector.load %arg4[%c0_4, %c0_5, %c0_6] : memref<1x1x256xf32, #tpu.memory_space<vmem>>, vector<1x1x256xf32>
    %5 = vector.shape_cast %4 : vector<1x1x256xf32> to vector<1x256xf32>
    %6 = vector.shape_cast %3 : vector<1x256xf32> to vector<1x1x256xf32>
    tpu.vector_store %arg4[%c0_4, %c0_5, %c0_6], %6 {strides = array<i32>} : memref<1x1x256xf32, #tpu.memory_space<vmem>>, vector<1x1x256xf32>,
    return
  }
  func.func @transform_0(%arg0: i32, %arg1: i32) -> (i32, i32, i32) {
    %c0_i32 = arith.constant 0 : i32
    %c0_i32_0 = arith.constant 0 : i32
    return %arg1, %arg0, %c0_i32 : i32, i32, i32
  }
  func.func @transform_1(%arg0: i32, %arg1: i32) -> (i32, i32) {
    %c0_i32 = arith.constant 0 : i32
    %c0_i32_0 = arith.constant 0 : i32
    return %arg0, %c0_i32 : i32, i32
  }
  func.func @transform_2(%arg0: i32, %arg1: i32) -> (i32, i32, i32) {
    %c0_i32 = arith.constant 0 : i32
    %c0_i32_0 = arith.constant 0 : i32
    return %arg1, %arg0, %c0_i32 : i32, i32, i32
  }
}

</mosaic_0001>

<llo_original>
// kernel: tpu_custom_call.1
$region0: #{tpu_custom_call.1}
  #allocation0 [shape = 'u32[]', space=smem, size = 0x4, offset = 0x4, fixed_abs, tag = 'smem constant byte address 0x4 - core index']
  #allocation1 [shape = 'u32[72,128]{1,0:T(1,128)}', space=vmem, size = 0x9000, scoped, tag = 'internal scratch']
  %s0 = inlined_call_operand.hbm [shape: f32[2,1,256], index: 0, kind: input, shape index: {}]
  %s1 = inlined_call_operand.hbm [shape: f32[1,256], index: 1, kind: input, shape index: {}]
  %s2 = inlined_call_operand.hbm [shape: f32[2,1,256], index: 2, kind: output, shape index: {}]
  %s3 = sld [smem:[#allocation0]]
  $region49: #{tpu_custom_call.1} parent=0
    _
  %s5 = ssub.s32 1, %s3
  %s6 = scalar_select 0, %s5, %s3
  $region1: #{tpu_custom_call.1} parent=0
    #allocation2 [shape = 'u8[2048]{0}', space=vmem, size = 0x800, scoped, tag = 'input window, operand 0']
    #allocation3 [shape = 's32[2]{0}', space=sflag, size = 0x8, scoped, tag = 'scoped memory for tpu_custom_call.1']
    #allocation4 [shape = 's32[2]{0}', space=sflag, size = 0x8, scoped, tag = 'scoped memory for tpu_custom_call.1']
    #allocation5 [shape = 'u8[1024]{0}', space=vmem, size = 0x400, scoped, tag = 'input window, operand 1, single buffered']
    #allocation6 [shape = 's32[1]{0}', space=sflag, size = 0x4, scoped, tag = 'scoped memory for tpu_custom_call.1']
    #allocation7 [shape = 'u8[2048]{0}', space=vmem, size = 0x800, scoped, tag = 'output window, operand 0']
    %7 = vsyncpa [#allocation3], 0
    %s8 = scalar_lea.sflag [#allocation3], 1
    %9 = vsyncpa %s8, 0
    %10 = vsyncpa [#allocation6], 0
    %11 = vsyncpa [#allocation4], 0
    %s12 = scalar_lea.sflag [#allocation4], 1
    %13 = vsyncpa %s12, 0
    loop: start=0, step=1, limit=4
    $region2: #{tpu_custom_call.1} parent=1 // loop_pre_header
      _
    $region3: #{tpu_custom_call.1} parent=1 // loop_header
      %s15 = sphi 0, %s19
      %p16 = scmp.ge.s32.totalorder %s15, 4
      %s22 = sphi 0, %s34
      %s23 = sphi 0, %s30
      %s24 = sphi 0, %s22
      %s25 = sphi 0, %s23
      %s26 = sphi 0, %s24
      %s27 = sphi 0, %s25
      %s39 = sphi 0, %s41
      %s42 = sphi 0, %s39
      %s43 = sphi 0, %s42
      %s59 = sphi 0, %s43
      %s65 = sphi 0, %s67
      %s68 = sphi 0, %s65
      %s69 = sphi 0, %s68
      %s85 = sphi 0, %s69
      %s93 = sphi 0, %s95
      %s96 = sphi 0, %s93
      %s97 = sphi 0, %s96
      %s113 = sphi 0, %s97
    $region4: #{tpu_custom_call.1} parent=1 // loop_header_branch
      %18 = sbr.rel (%p16) target = $region8
    $region5: #{tpu_custom_call.1} parent=1 // loop_body
      %s20 = ssub.s32 %s15, 1
      %s21 = ssub.s32 %s15, 2
      %s28 = sadd.s32 1, %s23
      %p29 = scmp.ge.s32.totalorder %s28, 2
      %s30 = scalar_select %p29, 0, %s28
      %s31 = sadd.s32 1, %s22
      %s32 = scalar_select %p29, %s31, %s22
      %p33 = scmp.ge.s32.totalorder %s32, 1
      %s34 = scalar_select %p33, 0, %s32
      %s35 = ssub.s32 %s23, %s30
      %s36 = ssub.s32 %s22, %s34
      %s37 = sor.u32 %s35, %s36
      %p38 = scmp.eq.s32.totalorder %s37, 0
      %s40 = sadd.s32 %s39, 1
      %s41 = scalar_select %p38, %s39, %s40
      %p44 = pneg %p38
      %p45 = scmp.eq.s32.totalorder %s15, 1
      %p46 = por %p44, %p45
      %p47 = scmp.ne.s32.totalorder %s39, %s42
      %p48 = scmp.eq.s32.totalorder %s15, 0
      %p49 = por %p47, %p48
      %p50 = scmp.ne.s32.totalorder %s39, %s42
      %p51 = scmp.eq.s32.totalorder %s20, 1
      %p52 = por %p50, %p51
      %p53 = scmp.ne.s32.totalorder %s42, %s43
      %p54 = scmp.eq.s32.totalorder %s20, 0
      %p55 = por %p53, %p54
      %p56 = scmp.ne.s32.totalorder %s42, %s43
      %p57 = scmp.eq.s32.totalorder %s21, 1
      %p58 = por %p56, %p57
      %p60 = scmp.ne.s32.totalorder %s43, %s59
      %p61 = scmp.eq.s32.totalorder %s21, 0
      %p62 = por %p60, %p61
      %s63 = ssub.s32 %s22, %s34
      %p64 = scmp.eq.s32.totalorder %s63, 0
      %s66 = sadd.s32 %s65, 1
      %s67 = scalar_select %p64, %s65, %s66
      %p70 = pneg %p64
      %p71 = scmp.eq.s32.totalorder %s15, 1
      %p72 = por %p70, %p71
      %p73 = scmp.ne.s32.totalorder %s65, %s68
      %p74 = scmp.eq.s32.totalorder %s15, 0
      %p75 = por %p73, %p74
      %p76 = scmp.ne.s32.totalorder %s65, %s68
      %p77 = scmp.eq.s32.totalorder %s20, 1
      %p78 = por %p76, %p77
      %p79 = scmp.ne.s32.totalorder %s68, %s69
      %p80 = scmp.eq.s32.totalorder %s20, 0
      %p81 = por %p79, %p80
      %p82 = scmp.ne.s32.totalorder %s68, %s69
      %p83 = scmp.eq.s32.totalorder %s21, 1
      %p84 = por %p82, %p83
      %p86 = scmp.ne.s32.totalorder %s69, %s85
      %p87 = scmp.eq.s32.totalorder %s21, 0
      %p88 = por %p86, %p87
      %s89 = ssub.s32 %s23, %s30
      %s90 = ssub.s32 %s22, %s34
      %s91 = sor.u32 %s89, %s90
      %p92 = scmp.eq.s32.totalorder %s91, 0
      %s94 = sadd.s32 %s93, 1
      %s95 = scalar_select %p92, %s93, %s94
      %p98 = pneg %p92
      %p99 = scmp.eq.s32.totalorder %s15, 1
      %p100 = por %p98, %p99
      %p101 = scmp.ne.s32.totalorder %s93, %s96
      %p102 = scmp.eq.s32.totalorder %s15, 0
      %p103 = por %p101, %p102
      %p104 = scmp.ne.s32.totalorder %s93, %s96
      %p105 = scmp.eq.s32.totalorder %s20, 1
      %p106 = por %p104, %p105
      %p107 = scmp.ne.s32.totalorder %s96, %s97
      %p108 = scmp.eq.s32.totalorder %s20, 0
      %p109 = por %p107, %p108
      %p110 = scmp.ne.s32.totalorder %s96, %s97
      %p111 = scmp.eq.s32.totalorder %s21, 1
      %p112 = por %p110, %p111
      %p114 = scmp.ne.s32.totalorder %s97, %s113
      %p115 = scmp.eq.s32.totalorder %s21, 0
      %p116 = por %p114, %p115
      %p117 = scmp.le.s32.totalorder 1, %s15
      %p118 = scmp.lt.s32.totalorder %s15, 3
      %p119 = pnand %p117, %p118
      %p120 = pneg %p119
      // Predicated region
      $region9: #{tpu_custom_call.1} parent=5 // pred_check
        _
      $region10: #{tpu_custom_call.1} parent=5 // pred_check_branch
        %122 = sbr.rel (%p119) target = $region12
      $region11: #{tpu_custom_call.1} parent=5 // pred_region
        %s123 = ssub.s32 %s15, 1
        // Predicated region
        $region13: #{tpu_custom_call.1} parent=11 // pred_check
          %p124 = pneg %p81
        $region14: #{tpu_custom_call.1} parent=11 // pred_check_branch
          %126 = sbr.rel (%p124) target = $region16
        $region15: #{tpu_custom_call.1} parent=11 // pred_region
          %128 = vsyncadd [#allocation6], 0
          %s129 = smul.addr %s24, 2
          %s130 = scalar_lea.hbm %s1, %s129
          %s132 = sshll.u32 %s130, 4
          %s133 = int_to_ptr.hbm [resolvable:$true] %s132
          %s134 = sshll.u32 [#allocation5], 4
          %s135 = int_to_ptr.vmem [resolvable:$true] %s134
          %137 = dma.hbm_to_vmem [thread:$0]  %s133, 32, %s135, [#allocation6]
        $region16: #{tpu_custom_call.1} parent=11 // pred_fallthru
          _
      $region12: #{tpu_custom_call.1} parent=5 // pred_fallthru
        _
      %p138 = scmp.lt.s32.totalorder %s15, 2
      // Predicated region
      $region17: #{tpu_custom_call.1} parent=5 // pred_check
        %p139 = pneg %p138
      $region18: #{tpu_custom_call.1} parent=5 // pred_check_branch
        %141 = sbr.rel (%p139) target = $region20
      $region19: #{tpu_custom_call.1} parent=5 // pred_region
        // Predicated region
        $region21: #{tpu_custom_call.1} parent=19 // pred_check
          %p142 = pneg %p49
        $region22: #{tpu_custom_call.1} parent=19 // pred_check_branch
          %144 = sbr.rel (%p142) target = $region24
        $region23: #{tpu_custom_call.1} parent=19 // pred_region
          %s145 = sand.u32 %s39, 1
          %s146 = scalar_lea.sflag [#allocation3], %s145
          %s147 = sand.u32 %s39, 1
          %s148 = smul.addr %s147, 2
          %s149 = scalar_lea.vmem [#allocation2], %s148
          %151 = vsyncadd %s146, 0
          %s152 = smul.addr %s22, 2
          %s153 = smul.addr %s23, 2
          %s154 = sadd.s32 %s152, %s153
          %s155 = scalar_lea.hbm %s0, %s154
          %s157 = sshll.u32 %s155, 4
          %s158 = int_to_ptr.hbm [resolvable:$true] %s157
          %s159 = sshll.u32 %s149, 4
          %s160 = int_to_ptr.vmem [resolvable:$true] %s159
          %162 = dma.hbm_to_vmem [thread:$0]  %s158, 32, %s160, %s146
        $region24: #{tpu_custom_call.1} parent=19 // pred_fallthru
          _
      $region20: #{tpu_custom_call.1} parent=5 // pred_fallthru
        _
      %p163 = scmp.le.s32.totalorder 1, %s15
      %p164 = scmp.lt.s32.totalorder %s15, 3
      %p165 = pnand %p163, %p164
      %p166 = pneg %p165
      // Predicated region
      $region25: #{tpu_custom_call.1} parent=5 // pred_check
        _
      $region26: #{tpu_custom_call.1} parent=5 // pred_check_branch
        %168 = sbr.rel (%p165) target = $region28
      $region27: #{tpu_custom_call.1} parent=5 // pred_region
        %s169 = ssub.s32 %s15, 1
        %s170 = sand.u32 %s42, 1
        %s171 = scalar_lea.sflag [#allocation3], %s170
        %s172 = sand.u32 %s42, 1
        %s173 = smul.addr %s172, 2
        %s174 = scalar_lea.vmem [#allocation2], %s173
        // Predicated region
        $region29: #{tpu_custom_call.1} parent=27 // pred_check
          %p175 = pneg %p55
        $region30: #{tpu_custom_call.1} parent=27 // pred_check_branch
          %177 = sbr.rel (%p175) target = $region32
        $region31: #{tpu_custom_call.1} parent=27 // pred_region
          %179 = dma.done %s171, 32
        $region32: #{tpu_custom_call.1} parent=27 // pred_fallthru
          _
        // Predicated region
        $region33: #{tpu_custom_call.1} parent=27 // pred_check
          %p180 = pneg %p81
        $region34: #{tpu_custom_call.1} parent=27 // pred_check_branch
          %182 = sbr.rel (%p180) target = $region36
        $region35: #{tpu_custom_call.1} parent=27 // pred_region
          %184 = dma.done [#allocation6], 32
        $region36: #{tpu_custom_call.1} parent=27 // pred_fallthru
          _
        %s185 = sand.u32 %s42, 1
        %s186 = scalar_lea.sflag [#allocation3], %s185
        %s187 = sand.u32 %s42, 1
        %s188 = smul.addr %s187, 2
        %s189 = scalar_lea.vmem [#allocation2], %s188
        %p190 = pneg %p55
        %p191 = pneg %p52
        %p192 = pneg %p81
        %p193 = pneg %p78
        %p194 = pneg %p109
        %p195 = pneg %p106
        %s196 = sand.u32 %s96, 1
        %s197 = scalar_lea.sflag [#allocation4], %s196
        %s198 = sand.u32 %s96, 1
        %s199 = smul.addr %s198, 2
        %s200 = scalar_lea.vmem [#allocation7], %s199
        %v201 = vld [vmem:[%s174] sm:$0x3]
        %v202 = vld [vmem:[#allocation5] sm:$0x3]
        %v203 = vadd.f32 %v201, %v202
        %v204 = vlaneseq
        %vm205 = vcmp.ge.s32.totalorder %v204, 0
        %vm206 = vcmp.lt.s32.totalorder %v204, 256
        %vm207 = vmand %vm205, %vm206
        %208 = vst.msk [vmem:[%s200] sm:$0x3] %vm207, %v203
        %s209 = sand.u32 %s96, 1
        %s210 = scalar_lea.sflag [#allocation4], %s209
        %s211 = sand.u32 %s96, 1
        %s212 = smul.addr %s211, 2
        %s213 = scalar_lea.vmem [#allocation7], %s212
        // Predicated region
        $region37: #{tpu_custom_call.1} parent=27 // pred_check
          %p214 = pneg %p106
        $region38: #{tpu_custom_call.1} parent=27 // pred_check_branch
          %216 = sbr.rel (%p214) target = $region40
        $region39: #{tpu_custom_call.1} parent=27 // pred_region
          %218 = vsyncadd %s210, 0
          %s219 = smul.addr %s24, 2
          %s220 = smul.addr %s25, 2
          %s221 = sadd.s32 %s219, %s220
          %s222 = scalar_lea.hbm %s2, %s221
          %s224 = sshll.u32 %s213, 4
          %s225 = int_to_ptr.vmem [resolvable:$true] %s224
          %s226 = sshll.u32 %s222, 4
          %s227 = int_to_ptr.hbm [resolvable:$true] %s226
          %229 = dma.vmem_to_hbm [thread:$0]  %s225, 32, %s227, %s210
        $region40: #{tpu_custom_call.1} parent=27 // pred_fallthru
          _
      $region28: #{tpu_custom_call.1} parent=5 // pred_fallthru
        _
      %p230 = scmp.le.s32.totalorder 2, %s15
      // Predicated region
      $region41: #{tpu_custom_call.1} parent=5 // pred_check
        %p231 = pneg %p230
      $region42: #{tpu_custom_call.1} parent=5 // pred_check_branch
        %233 = sbr.rel (%p231) target = $region44
      $region43: #{tpu_custom_call.1} parent=5 // pred_region
        %s234 = ssub.s32 %s15, 2
        // Predicated region
        $region45: #{tpu_custom_call.1} parent=43 // pred_check
          %p235 = pneg %p112
        $region46: #{tpu_custom_call.1} parent=43 // pred_check_branch
          %237 = sbr.rel (%p235) target = $region48
        $region47: #{tpu_custom_call.1} parent=43 // pred_region
          %s238 = sand.u32 %s97, 1
          %s239 = scalar_lea.sflag [#allocation4], %s238
          %s240 = sand.u32 %s97, 1
          %s241 = smul.addr %s240, 2
          %s242 = scalar_lea.vmem [#allocation7], %s241
          %244 = dma.done %s239, 32
        $region48: #{tpu_custom_call.1} parent=43 // pred_fallthru
          _
      $region44: #{tpu_custom_call.1} parent=5 // pred_fallthru
        _
    $region6: #{tpu_custom_call.1} parent=1 // loop_footer
      %s19 = sadd.s32 1, %s15
    $region7: #{tpu_custom_call.1} parent=1 // loop_footer_branch
      %14 = sbr.rel target = $region3
    $region8: #{tpu_custom_call.1} parent=1 // loop_exit
      _
    %245 = vsyncpa [#allocation3], 1
    %s246 = scalar_lea.sflag [#allocation3], 1
    %247 = vsyncpa %s246, 1
    %248 = vsyncpa [#allocation6], 1
    %249 = vsyncpa [#allocation4], 1
    %s250 = scalar_lea.sflag [#allocation4], 1
    %251 = vsyncpa %s250, 1

</llo_original>
